<compile_context>
chip_gen: v5e
topology: v5e:2x2
jax: 0.10.0
libtpu: 0.0.40
codegen_flags: <defaults>
</compile_context>

<pallas_src>
import jax
import jax.numpy as jnp
from jax.experimental import pallas as pl
from jax.experimental.pallas import tpu as pltpu


def _make_divisible(ch, divisor=8, min_ch=None):
    if min_ch is None:
        min_ch = divisor
    new_ch = max(min_ch, int(ch + divisor / 2) // divisor * divisor)
    if new_ch < 0.9 * ch:
        new_ch += divisor
    return new_ch


def _se_kernel(x_ref, w1_ref, b1_ref, w2_ref, b2_ref, o_ref):
    # x_ref: (nb, C, HW)   w1_ref: (C, S)  b1_ref: (1, S)
    # w2_ref: (S, C)       b2_ref: (1, C)  o_ref: (nb, C, HW)
    # adaptive_avg_pool2d to (1,1) == mean over spatial (lane-axis reduce).
    mean = jnp.mean(x_ref[...].astype(jnp.float32), axis=-1)          # (nb, C)
    # fc1 (1x1 conv) + ReLU
    h = jnp.dot(mean, w1_ref[...], preferred_element_type=jnp.float32) + b1_ref[...]
    h = jnp.maximum(h, 0.0)                                           # (nb, S)
    # fc2 (1x1 conv) + hardsigmoid: clip(t + 3, 0, 6) / 6
    t = jnp.dot(h, w2_ref[...], preferred_element_type=jnp.float32) + b2_ref[...]
    scale = jnp.clip(t + 3.0, 0.0, 6.0) * (1.0 / 6.0)                 # (nb, C)
    # Broadcast-multiply along lanes; re-read x_ref (don't hold f32 copy live).
    o_ref[...] = (x_ref[...].astype(jnp.float32)
                  * scale[:, :, None]).astype(o_ref.dtype)


def squeeze_excitation(x_nchw, w1, b1, w2, b2, *, max_block_bytes=6 << 20):
    """x_nchw: (N, C, H, W). w1: (C,S), b1: (S,), w2: (S,C), b2: (C,)."""
    N, C, H, W = x_nchw.shape
    S = w1.shape[1]
    HW = H * W

    # Channels-first kept: free, contiguous reshape (no HBM transpose traffic).
    x = x_nchw.reshape(N, C, HW)
    b1_2d = b1.reshape(1, S)
    b2_2d = b2.reshape(1, C)

    # Choose batch-fusion factor nb: largest divisor of N whose (nb, C, HW)
    # block fits the budget, preferring >= 2 grid steps for megacore sharding.
    itemsize = jnp.dtype(x.dtype).itemsize
    per_elem = C * HW * itemsize
    candidates = [d for d in range(1, N + 1)
                  if N % d == 0 and d * per_elem <= max_block_bytes]
    if not candidates:
        nb = 1  # TODO(synk): spatial tiling path for oversized single blocks.
    else:
        two_step = [d for d in candidates if N // d >= 2]
        nb = max(two_step) if two_step else max(candidates)
    grid = (N // nb,)

    # in+out double-buffered blocks + tiny weights, with headroom; safe on all gens.
    block_bytes = nb * per_elem
    vmem_limit = min(max(4 * block_bytes + (2 << 20), 16 << 20), 48 << 20)

    out = pl.pallas_call(
        _se_kernel,
        out_shape=jax.ShapeDtypeStruct((N, C, HW), x.dtype),
        grid_spec=pltpu.PrefetchScalarGridSpec(
            num_scalar_prefetch=0,
            grid=grid,
            in_specs=[
                pl.BlockSpec((nb, C, HW), lambda n: (n, 0, 0)),
                pl.BlockSpec((C, S), lambda n: (0, 0)),
                pl.BlockSpec((1, S), lambda n: (0, 0)),
                pl.BlockSpec((S, C), lambda n: (0, 0)),
                pl.BlockSpec((1, C), lambda n: (0, 0)),
            ],
            out_specs=pl.BlockSpec((nb, C, HW), lambda n: (n, 0, 0)),
        ),
        compiler_params=pltpu.CompilerParams(
            dimension_semantics=("parallel",),
            vmem_limit_bytes=vmem_limit),
    )(x, w1, b1_2d, w2, b2_2d)

    # Free reshape back to NCHW.
    return out.reshape(N, C, H, W)


def _reference(x_nchw, w1, b1, w2, b2):
    # Pure-JAX reference matching PyTorch semantics.
    mean = jnp.mean(x_nchw, axis=(2, 3))                   # (N, C)
    h = jnp.maximum(mean @ w1 + b1, 0.0)                   # (N, S)
    t = h @ w2 + b2                                        # (N, C)
    scale = jnp.clip(t + 3.0, 0.0, 6.0) / 6.0
    return scale[:, :, None, None] * x_nchw


if __name__ == "__main__":
    # Module config
    input_c = 16
    squeeze_factor = 4
    squeeze_c = _make_divisible(input_c // squeeze_factor, 8)  # -> 8

    N, C, H, W = 2, input_c, 16, 16

    key = jax.random.PRNGKey(0)
    kx, k1, k2, k3, k4 = jax.random.split(key, 5)

    x = jax.random.normal(kx, (N, C, H, W), dtype=jnp.float32)

    # fc1: Conv2d(input_c, squeeze_c, 1) -> weight (S, C, 1, 1); as matmul (C, S)
    w1 = jax.random.normal(k1, (C, squeeze_c), dtype=jnp.float32) * 0.1
    b1 = jax.random.normal(k2, (squeeze_c,), dtype=jnp.float32) * 0.1
    # fc2: Conv2d(squeeze_c, input_c, 1) -> weight (C, S, 1, 1); as matmul (S, C)
    w2 = jax.random.normal(k3, (squeeze_c, C), dtype=jnp.float32) * 0.1
    b2 = jax.random.normal(k4, (C,), dtype=jnp.float32) * 0.1

    out = squeeze_excitation(x, w1, b1, w2, b2)
    out = jax.block_until_ready(out)

    ref = _reference(x, w1, b1, w2, b2)
    assert out.shape == (N, C, H, W)
    assert jnp.allclose(out, ref, atol=1e-5, rtol=1e-5), "mismatch vs reference"

    print("KERNEL_OK")
</pallas_src>

<mosaic_0001>
module attributes {stable_mosaic.version = 11 : i64} {
  func.func @_se_kernel(%arg0: i32, %arg1: memref<1x16x256xf32, #tpu.memory_space<vmem>>, %arg2: memref<16x8xf32, #tpu.memory_space<vmem>>, %arg3: memref<1x8xf32, #tpu.memory_space<vmem>>, %arg4: memref<8x16xf32, #tpu.memory_space<vmem>>, %arg5: memref<1x16xf32, #tpu.memory_space<vmem>>, %arg6: memref<1x16x256xf32, #tpu.memory_space<vmem>>) attributes {dimension_semantics = [#tpu.dimension_semantics<parallel>], iteration_bounds = array<i64: 2>, scalar_prefetch = 0 : i64, scratch_operands = 0 : i64, tpu.core_type = #tpu.core_type<tc>, window_params = [{transform_indices = @transform_0, window_bounds = array<i64: 1, 16, 256>}, {pipeline_mode = #tpu.pipeline_mode<synchronous>, transform_indices = @transform_1, window_bounds = array<i64: 16, 8>}, {pipeline_mode = #tpu.pipeline_mode<synchronous>, transform_indices = @transform_2, window_bounds = array<i64: 1, 8>}, {pipeline_mode = #tpu.pipeline_mode<synchronous>, transform_indices = @transform_3, window_bounds = array<i64: 8, 16>}, {pipeline_mode = #tpu.pipeline_mode<synchronous>, transform_indices = @transform_4, window_bounds = array<i64: 1, 16>}, {transform_indices = @transform_5, window_bounds = array<i64: 1, 16, 256>}]} {
    %c0 = arith.constant 0 : index
    %c0_0 = arith.constant 0 : index
    %c0_1 = arith.constant 0 : index
    %0 = vector.load %arg1[%c0, %c0_0, %c0_1] : memref<1x16x256xf32, #tpu.memory_space<vmem>>, vector<1x16x256xf32>
    %cst = arith.constant dense<0.000000e+00> : vector<1x16xf32>
    %1 = vector.multi_reduction <add>, %0, %cst [2] : vector<1x16x256xf32> to vector<1x16xf32>
    %cst_2 = arith.constant 2.560000e+02 : f32
    %2 = vector.broadcast %cst_2 : f32 to vector<1x16xf32>
    %3 = arith.divf %1, %2 : vector<1x16xf32>
    %c0_3 = arith.constant 0 : index
    %c0_4 = arith.constant 0 : index
    %4 = vector.load %arg2[%c0_3, %c0_4] : memref<16x8xf32, #tpu.memory_space<vmem>>, vector<16x8xf32>
    %cst_5 = arith.constant dense<0.000000e+00> : vector<1x8xf32>
    %5 = tpu.matmul %3, %4, %cst_5 {dimension_numbers = #tpu.dot_dimension_numbers<[1], [0], [0], [1], [0, 0, 1, 1], [], []>} : vector<1x16xf32>, vector<16x8xf32>, vector<1x8xf32> -> vector<1x8xf32>
    %c0_6 = arith.constant 0 : index
    %c0_7 = arith.constant 0 : index
    %6 = vector.load %arg3[%c0_6, %c0_7] : memref<1x8xf32, #tpu.memory_space<vmem>>, vector<1x8xf32>
    %7 = arith.addf %5, %6 : vector<1x8xf32>
    %cst_8 = arith.constant 0.000000e+00 : f32
    %8 = vector.broadcast %cst_8 : f32 to vector<1x8xf32>
    %9 = arith.maximumf %7, %8 : vector<1x8xf32>
    %c0_9 = arith.constant 0 : index
    %c0_10 = arith.constant 0 : index
    %10 = vector.load %arg4[%c0_9, %c0_10] : memref<8x16xf32, #tpu.memory_space<vmem>>, vector<8x16xf32>
    %cst_11 = arith.constant dense<0.000000e+00> : vector<1x16xf32>
    %11 = tpu.matmul %9, %10, %cst_11 {dimension_numbers = #tpu.dot_dimension_numbers<[1], [0], [0], [1], [0, 0, 1, 1], [], []>} : vector<1x8xf32>, vector<8x16xf32>, vector<1x16xf32> -> vector<1x16xf32>
    %c0_12 = arith.constant 0 : index
    %c0_13 = arith.constant 0 : index
    %12 = vector.load %arg5[%c0_12, %c0_13] : memref<1x16xf32, #tpu.memory_space<vmem>>, vector<1x16xf32>
    %13 = arith.addf %11, %12 : vector<1x16xf32>
    %cst_14 = arith.constant 3.000000e+00 : f32
    %14 = vector.broadcast %cst_14 : f32 to vector<1x16xf32>
    %15 = arith.addf %13, %14 : vector<1x16xf32>
    %cst_15 = arith.constant 0.000000e+00 : f32
    %cst_16 = arith.constant 6.000000e+00 : f32
    %16 = vector.broadcast %cst_15 : f32 to vector<1x16xf32>
    %17 = arith.maximumf %16, %15 : vector<1x16xf32>
    %18 = vector.broadcast %cst_16 : f32 to vector<1x16xf32>
    %19 = arith.minimumf %18, %17 : vector<1x16xf32>
    %cst_17 = arith.constant 0.166666672 : f32
    %20 = vector.broadcast %cst_17 : f32 to vector<1x16xf32>
    %21 = arith.mulf %19, %20 : vector<1x16xf32>
    %c0_18 = arith.constant 0 : index
    %c0_19 = arith.constant 0 : index
    %c0_20 = arith.constant 0 : index
    %22 = vector.load %arg1[%c0_18, %c0_19, %c0_20] : memref<1x16x256xf32, #tpu.memory_space<vmem>>, vector<1x16x256xf32>
    %23 = vector.shape_cast %21 : vector<1x16xf32> to vector<1x16x1xf32>
    %24 = vector.broadcast %23 : vector<1x16x1xf32> to vector<1x16x256xf32>
    %25 = arith.mulf %22, %24 : vector<1x16x256xf32>
    %c0_21 = arith.constant 0 : index
    %c0_22 = arith.constant 0 : index
    %c0_23 = arith.constant 0 : index
    %26 = vector.load %arg6[%c0_21, %c0_22, %c0_23] : memref<1x16x256xf32, #tpu.memory_space<vmem>>, vector<1x16x256xf32>
    tpu.vector_store %arg6[%c0_21, %c0_22, %c0_23], %25 {strides = array<i32>} : memref<1x16x256xf32, #tpu.memory_space<vmem>>, vector<1x16x256xf32>,
    return
  }
  func.func @transform_0(%arg0: i32) -> (i32, i32, i32) {
    %c0_i32 = arith.constant 0 : i32
    %c0_i32_0 = arith.constant 0 : i32
    %c0_i32_1 = arith.constant 0 : i32
    return %arg0, %c0_i32, %c0_i32_0 : i32, i32, i32
  }
  func.func @transform_1(%arg0: i32) -> (i32, i32) {
    %c0_i32 = arith.constant 0 : i32
    %c0_i32_0 = arith.constant 0 : i32
    %c0_i32_1 = arith.constant 0 : i32
    return %c0_i32, %c0_i32_0 : i32, i32
  }
  func.func @transform_2(%arg0: i32) -> (i32, i32) {
    %c0_i32 = arith.constant 0 : i32
    %c0_i32_0 = arith.constant 0 : i32
    %c0_i32_1 = arith.constant 0 : i32
    return %c0_i32, %c0_i32_0 : i32, i32
  }
  func.func @transform_3(%arg0: i32) -> (i32, i32) {
    %c0_i32 = arith.constant 0 : i32
    %c0_i32_0 = arith.constant 0 : i32
    %c0_i32_1 = arith.constant 0 : i32
    return %c0_i32, %c0_i32_0 : i32, i32
  }
  func.func @transform_4(%arg0: i32) -> (i32, i32) {
    %c0_i32 = arith.constant 0 : i32
    %c0_i32_0 = arith.constant 0 : i32
    %c0_i32_1 = arith.constant 0 : i32
    return %c0_i32, %c0_i32_0 : i32, i32
  }
  func.func @transform_5(%arg0: i32) -> (i32, i32, i32) {
    %c0_i32 = arith.constant 0 : i32
    %c0_i32_0 = arith.constant 0 : i32
    %c0_i32_1 = arith.constant 0 : i32
    return %arg0, %c0_i32, %c0_i32_0 : i32, i32, i32
  }
}

</mosaic_0001>

<llo_original>
// kernel: tpu_custom_call.1
$region0: #{tpu_custom_call.1}
  #allocation0 [shape = 'u32[]', space=smem, size = 0x4, offset = 0x4, fixed_abs, tag = 'smem constant byte address 0x4 - core index']
  #allocation1 [shape = 'u32[72,128]{1,0:T(1,128)}', space=vmem, size = 0x9000, scoped, tag = 'internal scratch']
  %s0 = inlined_call_operand.hbm [shape: f32[2,16,256], index: 0, kind: input, shape index: {}]
  %s1 = inlined_call_operand.vmem [shape: f32[16,8], index: 1, kind: input, shape index: {}]
  %s2 = inlined_call_operand.vmem [shape: f32[1,8], index: 2, kind: input, shape index: {}]
  %s3 = inlined_call_operand.vmem [shape: f32[8,16], index: 3, kind: input, shape index: {}]
  %s4 = inlined_call_operand.vmem [shape: f32[1,16], index: 4, kind: input, shape index: {}]
  %s5 = inlined_call_operand.hbm [shape: f32[2,16,256], index: 5, kind: output, shape index: {}]
  %s6 = sld [smem:[#allocation0]]
  $region57: #{tpu_custom_call.1} parent=0
    _
  %s8 = ssub.s32 1, %s6
  %s9 = scalar_select 0, %s8, %s6
  $region1: #{tpu_custom_call.1} parent=0
    #allocation2 [shape = 'u8[32768]{0}', space=vmem, size = 0x8000, scoped, tag = 'input window, operand 0']
    #allocation3 [shape = 's32[2]{0}', space=sflag, size = 0x8, scoped, tag = 'scoped memory for tpu_custom_call.1']
    #allocation4 [shape = 's32[2]{0}', space=sflag, size = 0x8, scoped, tag = 'scoped memory for tpu_custom_call.1']
    #allocation5 [shape = 'u8[32768]{0}', space=vmem, size = 0x8000, scoped, tag = 'output window, operand 0']
    %10 = vsyncpa [#allocation3], 0
    %s11 = scalar_lea.sflag [#allocation3], 1
    %12 = vsyncpa %s11, 0
    %13 = vsyncpa [#allocation4], 0
    %s14 = scalar_lea.sflag [#allocation4], 1
    %15 = vsyncpa %s14, 0
    loop: start=0, step=1, limit=4
    $region2: #{tpu_custom_call.1} parent=1 // loop_pre_header
      _
    $region3: #{tpu_custom_call.1} parent=1 // loop_header
      %s17 = sphi 0, %s21
      %p18 = scmp.ge.s32.totalorder %s17, 4
      %s27 = sphi 0, %s29
      %s30 = sphi 0, %s27
      %s31 = sphi 0, %s30
      %s47 = sphi 0, %s31
      %s51 = sphi 0, %s51
      %s53 = sphi 0, %s51
      %s54 = sphi 0, %s53
      %s68 = sphi 0, %s54
      %s72 = sphi 0, %s72
      %s74 = sphi 0, %s72
      %s75 = sphi 0, %s74
      %s89 = sphi 0, %s75
      %s93 = sphi 0, %s93
      %s95 = sphi 0, %s93
      %s96 = sphi 0, %s95
      %s110 = sphi 0, %s96
      %s114 = sphi 0, %s114
      %s116 = sphi 0, %s114
      %s117 = sphi 0, %s116
      %s131 = sphi 0, %s117
      %s137 = sphi 0, %s139
      %s140 = sphi 0, %s137
      %s141 = sphi 0, %s140
      %s157 = sphi 0, %s141
    $region4: #{tpu_custom_call.1} parent=1 // loop_header_branch
      %20 = sbr.rel (%p18) target = $region8
    $region5: #{tpu_custom_call.1} parent=1 // loop_body
      %s22 = ssub.s32 %s17, 1
      %s23 = ssub.s32 %s17, 2
      %s24 = sadd.s32 %s17, 1
      %s25 = ssub.s32 %s17, %s24
      %p26 = scmp.eq.s32.totalorder %s25, 0
      %s28 = sadd.s32 %s27, 1
      %s29 = scalar_select %p26, %s27, %s28
      %p32 = pneg %p26
      %p33 = scmp.eq.s32.totalorder %s17, 1
      %p34 = por %p32, %p33
      %p35 = scmp.ne.s32.totalorder %s27, %s30
      %p36 = scmp.eq.s32.totalorder %s17, 0
      %p37 = por %p35, %p36
      %p38 = scmp.ne.s32.totalorder %s27, %s30
      %p39 = scmp.eq.s32.totalorder %s22, 1
      %p40 = por %p38, %p39
      %p41 = scmp.ne.s32.totalorder %s30, %s31
      %p42 = scmp.eq.s32.totalorder %s22, 0
      %p43 = por %p41, %p42
      %p44 = scmp.ne.s32.totalorder %s30, %s31
      %p45 = scmp.eq.s32.totalorder %s23, 1
      %p46 = por %p44, %p45
      %p48 = scmp.ne.s32.totalorder %s31, %s47
      %p49 = scmp.eq.s32.totalorder %s23, 0
      %p50 = por %p48, %p49
      %s52 = sadd.s32 %s51, 1
      %p55 = scmp.eq.s32.totalorder %s17, 1
      %p56 = scmp.ne.s32.totalorder %s51, %s53
      %p57 = scmp.eq.s32.totalorder %s17, 0
      %p58 = por %p56, %p57
      %p59 = scmp.ne.s32.totalorder %s51, %s53
      %p60 = scmp.eq.s32.totalorder %s22, 1
      %p61 = por %p59, %p60
      %p62 = scmp.ne.s32.totalorder %s53, %s54
      %p63 = scmp.eq.s32.totalorder %s22, 0
      %p64 = por %p62, %p63
      %p65 = scmp.ne.s32.totalorder %s53, %s54
      %p66 = scmp.eq.s32.totalorder %s23, 1
      %p67 = por %p65, %p66
      %p69 = scmp.ne.s32.totalorder %s54, %s68
      %p70 = scmp.eq.s32.totalorder %s23, 0
      %p71 = por %p69, %p70
      %s73 = sadd.s32 %s72, 1
      %p76 = scmp.eq.s32.totalorder %s17, 1
      %p77 = scmp.ne.s32.totalorder %s72, %s74
      %p78 = scmp.eq.s32.totalorder %s17, 0
      %p79 = por %p77, %p78
      %p80 = scmp.ne.s32.totalorder %s72, %s74
      %p81 = scmp.eq.s32.totalorder %s22, 1
      %p82 = por %p80, %p81
      %p83 = scmp.ne.s32.totalorder %s74, %s75
      %p84 = scmp.eq.s32.totalorder %s22, 0
      %p85 = por %p83, %p84
      %p86 = scmp.ne.s32.totalorder %s74, %s75
      %p87 = scmp.eq.s32.totalorder %s23, 1
      %p88 = por %p86, %p87
      %p90 = scmp.ne.s32.totalorder %s75, %s89
      %p91 = scmp.eq.s32.totalorder %s23, 0
      %p92 = por %p90, %p91
      %s94 = sadd.s32 %s93, 1
      %p97 = scmp.eq.s32.totalorder %s17, 1
      %p98 = scmp.ne.s32.totalorder %s93, %s95
      %p99 = scmp.eq.s32.totalorder %s17, 0
      %p100 = por %p98, %p99
      %p101 = scmp.ne.s32.totalorder %s93, %s95
      %p102 = scmp.eq.s32.totalorder %s22, 1
      %p103 = por %p101, %p102
      %p104 = scmp.ne.s32.totalorder %s95, %s96
      %p105 = scmp.eq.s32.totalorder %s22, 0
      %p106 = por %p104, %p105
      %p107 = scmp.ne.s32.totalorder %s95, %s96
      %p108 = scmp.eq.s32.totalorder %s23, 1
      %p109 = por %p107, %p108
      %p111 = scmp.ne.s32.totalorder %s96, %s110
      %p112 = scmp.eq.s32.totalorder %s23, 0
      %p113 = por %p111, %p112
      %s115 = sadd.s32 %s114, 1
      %p118 = scmp.eq.s32.totalorder %s17, 1
      %p119 = scmp.ne.s32.totalorder %s114, %s116
      %p120 = scmp.eq.s32.totalorder %s17, 0
      %p121 = por %p119, %p120
      %p122 = scmp.ne.s32.totalorder %s114, %s116
      %p123 = scmp.eq.s32.totalorder %s22, 1
      %p124 = por %p122, %p123
      %p125 = scmp.ne.s32.totalorder %s116, %s117
      %p126 = scmp.eq.s32.totalorder %s22, 0
      %p127 = por %p125, %p126
      %p128 = scmp.ne.s32.totalorder %s116, %s117
      %p129 = scmp.eq.s32.totalorder %s23, 1
      %p130 = por %p128, %p129
      %p132 = scmp.ne.s32.totalorder %s117, %s131
      %p133 = scmp.eq.s32.totalorder %s23, 0
      %p134 = por %p132, %p133
      %s135 = ssub.s32 %s17, %s24
      %p136 = scmp.eq.s32.totalorder %s135, 0
      %s138 = sadd.s32 %s137, 1
      %s139 = scalar_select %p136, %s137, %s138
      %p142 = pneg %p136
      %p143 = scmp.eq.s32.totalorder %s17, 1
      %p144 = por %p142, %p143
      %p145 = scmp.ne.s32.totalorder %s137, %s140
      %p146 = scmp.eq.s32.totalorder %s17, 0
      %p147 = por %p145, %p146
      %p148 = scmp.ne.s32.totalorder %s137, %s140
      %p149 = scmp.eq.s32.totalorder %s22, 1
      %p150 = por %p148, %p149
      %p151 = scmp.ne.s32.totalorder %s140, %s141
      %p152 = scmp.eq.s32.totalorder %s22, 0
      %p153 = por %p151, %p152
      %p154 = scmp.ne.s32.totalorder %s140, %s141
      %p155 = scmp.eq.s32.totalorder %s23, 1
      %p156 = por %p154, %p155
      %p158 = scmp.ne.s32.totalorder %s141, %s157
      %p159 = scmp.eq.s32.totalorder %s23, 0
      %p160 = por %p158, %p159
      %p161 = scmp.le.s32.totalorder 1, %s17
      %p162 = scmp.lt.s32.totalorder %s17, 3
      %p163 = pnand %p161, %p162
      %p164 = pneg %p163
      // Predicated region
      $region9: #{tpu_custom_call.1} parent=5 // pred_check
        _
      $region10: #{tpu_custom_call.1} parent=5 // pred_check_branch
        %166 = sbr.rel (%p163) target = $region12
      $region11: #{tpu_custom_call.1} parent=5 // pred_region
        %s167 = ssub.s32 %s17, 1
        // Predicated region
        $region13: #{tpu_custom_call.1} parent=11 // pred_check
          %p168 = pneg %p64
        $region14: #{tpu_custom_call.1} parent=11 // pred_check_branch
          %170 = sbr.rel (%p168) target = $region16
        $region15: #{tpu_custom_call.1} parent=11 // pred_region
          _
        $region16: #{tpu_custom_call.1} parent=11 // pred_fallthru
          _
        // Predicated region
        $region17: #{tpu_custom_call.1} parent=11 // pred_check
          %p171 = pneg %p85
        $region18: #{tpu_custom_call.1} parent=11 // pred_check_branch
          %173 = sbr.rel (%p171) target = $region20
        $region19: #{tpu_custom_call.1} parent=11 // pred_region
          _
        $region20: #{tpu_custom_call.1} parent=11 // pred_fallthru
          _
        // Predicated region
        $region21: #{tpu_custom_call.1} parent=11 // pred_check
          %p174 = pneg %p106
        $region22: #{tpu_custom_call.1} parent=11 // pred_check_branch
          %176 = sbr.rel (%p174) target = $region24
        $region23: #{tpu_custom_call.1} parent=11 // pred_region
          _
        $region24: #{tpu_custom_call.1} parent=11 // pred_fallthru
          _
        // Predicated region
        $region25: #{tpu_custom_call.1} parent=11 // pred_check
          %p177 = pneg %p127
        $region26: #{tpu_custom_call.1} parent=11 // pred_check_branch
          %179 = sbr.rel (%p177) target = $region28
        $region27: #{tpu_custom_call.1} parent=11 // pred_region
          _
        $region28: #{tpu_custom_call.1} parent=11 // pred_fallthru
          _
      $region12: #{tpu_custom_call.1} parent=5 // pred_fallthru
        _
      %p180 = scmp.lt.s32.totalorder %s17, 2
      // Predicated region
      $region29: #{tpu_custom_call.1} parent=5 // pred_check
        %p181 = pneg %p180
      $region30: #{tpu_custom_call.1} parent=5 // pred_check_branch
        %183 = sbr.rel (%p181) target = $region32
      $region31: #{tpu_custom_call.1} parent=5 // pred_region
        // Predicated region
        $region33: #{tpu_custom_call.1} parent=31 // pred_check
          %p184 = pneg %p37
        $region34: #{tpu_custom_call.1} parent=31 // pred_check_branch
          %186 = sbr.rel (%p184) target = $region36
        $region35: #{tpu_custom_call.1} parent=31 // pred_region
          %s187 = sand.u32 %s27, 1
          %s188 = scalar_lea.sflag [#allocation3], %s187
          %s189 = sand.u32 %s27, 1
          %s190 = smul.addr %s189, 32
          %s191 = scalar_lea.vmem [#allocation2], %s190
          %193 = vsyncadd %s188, 0
          %s194 = smul.addr %s17, 4
          %s195 = smul.addr %s194, 8
          %s196 = scalar_lea.hbm %s0, %s195
          %s197 = sshll.u32 %s196, 4
          %s198 = int_to_ptr.hbm [resolvable:$true] %s197
          %s199 = sshll.u32 %s191, 4
          %s200 = int_to_ptr.vmem [resolvable:$true] %s199
          %205 = dma.hbm_to_vmem [thread:$0]  %s198, 512, %s200, %s188, 256, 256, 16
        $region36: #{tpu_custom_call.1} parent=31 // pred_fallthru
          _
      $region32: #{tpu_custom_call.1} parent=5 // pred_fallthru
        _
      %p206 = scmp.le.s32.totalorder 1, %s17
      %p207 = scmp.lt.s32.totalorder %s17, 3
      %p208 = pnand %p206, %p207
      %p209 = pneg %p208
      // Predicated region
      $region37: #{tpu_custom_call.1} parent=5 // pred_check
        _
      $region38: #{tpu_custom_call.1} parent=5 // pred_check_branch
        %211 = sbr.rel (%p208) target = $region40
      $region39: #{tpu_custom_call.1} parent=5 // pred_region
        %s212 = ssub.s32 %s17, 1
        %s213 = sand.u32 %s30, 1
        %s214 = scalar_lea.sflag [#allocation3], %s213
        %s215 = sand.u32 %s30, 1
        %s216 = smul.addr %s215, 32
        %s217 = scalar_lea.vmem [#allocation2], %s216
        // Predicated region
        $region41: #{tpu_custom_call.1} parent=39 // pred_check
          %p218 = pneg %p43
        $region42: #{tpu_custom_call.1} parent=39 // pred_check_branch
          %220 = sbr.rel (%p218) target = $region44
        $region43: #{tpu_custom_call.1} parent=39 // pred_region
          %222 = dma.done %s214, 512
        $region44: #{tpu_custom_call.1} parent=39 // pred_fallthru
          _
        %s223 = sand.u32 %s30, 1
        %s224 = scalar_lea.sflag [#allocation3], %s223
        %s225 = sand.u32 %s30, 1
        %s226 = smul.addr %s225, 32
        %s227 = scalar_lea.vmem [#allocation2], %s226
        %p228 = pneg %p43
        %p229 = pneg %p40
        %p230 = pneg %p64
        %p231 = pneg %p61
        %p232 = pneg %p85
        %p233 = pneg %p82
        %p234 = pneg %p106
        %p235 = pneg %p103
        %p236 = pneg %p127
        %p237 = pneg %p124
        %p238 = pneg %p153
        %p239 = pneg %p150
        %s240 = sand.u32 %s140, 1
        %s241 = scalar_lea.sflag [#allocation4], %s240
        %s242 = sand.u32 %s140, 1
        %s243 = smul.addr %s242, 32
        %s244 = scalar_lea.vmem [#allocation5], %s243
        %v245 = vld [vmem:[%s217] sm:$0xff]
        %v246 = vld [vmem:[%s217 + $0x8] sm:$0xff]
        %v247 = vld [vmem:[%s217 + $0x10] sm:$0xff]
        %v248 = vld [vmem:[%s217 + $0x18] sm:$0xff]
        %v249 = vadd.f32 %v245, %v246
        %250 = vadd.xlane.f32.xlu0 %v249
        %v251 = vpop.xlane.xlu0 %250
        %v252 = vadd.f32 %v247, %v248
        %253 = vadd.xlane.f32.xlu0 %v252
        %v254 = vpop.xlane.xlu0 %253
        %v255 = vrcp.pop 256.0
        %v256 = vmul.f32 256.0, %v255
        %v257 = vsub.f32 1.0, %v256
        %v258 = vmul.f32 %v255, %v257
        %v259 = vadd.f32 %v255, %v258
        %vm260 = vweird.f32 %v255
        %v261 = vsel %vm260, %v255, %v259
        %v262 = vmul.f32 %v251, %v261
        %v263 = vmul.f32 %v254, %v261
        %v264 = vld [vmem:[%s1] sm:$0xff]
        %v265 = vld [vmem:[%s1 + $0x8] sm:$0xff]
        %v266 = vld [vmem:[%s2] sm:$0x1]
        %v269 = vlaneseq
        %v270 = vand.u32 %v269, 127
        %v271 = vperm.slane %v262, %v270
        %v272 = vadd.s32 %v270, 4294967288
        %v273 = vperm.slane %v263, %v272
        %vm274 = vcmask 130112
        %v275 = vsel %vm274, %v273, %v271
        %vm276 = vcmask 130048
        %v277 = vsel %vm276, %v275, 0
        %279 = vmatpush.msra.mxu0 0.0
        %280 = vmatpush.msra.mxu0 0.0
        %281 = vmatpush.msra.mxu0 0.0
        %282 = vmatpush.msra.mxu0 0.0
        %283 = vmatpush.msra.mxu0 0.0
        %284 = vmatpush.msra.mxu0 0.0
        %285 = vmatpush.msra.mxu0 0.0
        %286 = vmatpush.msra.mxu0 0.0
        %287 = vmatpush.msra.mxu0 0.0
        %288 = vmatpush.msra.mxu0 0.0
        %289 = vmatpush.msra.mxu0 0.0
        %290 = vmatpush.msra.mxu0 0.0
        %291 = vmatpush.msra.mxu0 0.0
        %292 = vmatpush.msra.mxu0 0.0
        %293 = vmatpush.msra.mxu0 %v265
        %294 = vmatpush.msra.mxu0 %v264
        %295 = vmatmul.f32.gmra.mxu0 %v277
        %v296 = vpop.f32.mrf.mxu0
        %v297 = vadd.f32 %v266, %v296
        %298 = vdwg.mxu0
        %v299 = vmax.f32 %v297, 0.0
        %v300 = vld [vmem:[%s3] sm:$0xff]
        %v301 = vld [vmem:[%s4] sm:$0x1]
        %vm302 = vcmask 64512
        %v304 = vsel %vm302, %v299, 0
        %306 = vmatpush.msra.mxu0 0.0
        %307 = vmatpush.msra.mxu0 0.0
        %308 = vmatpush.msra.mxu0 0.0
        %309 = vmatpush.msra.mxu0 0.0
        %310 = vmatpush.msra.mxu0 0.0
        %311 = vmatpush.msra.mxu0 0.0
        %312 = vmatpush.msra.mxu0 0.0
        %313 = vmatpush.msra.mxu0 0.0
        %314 = vmatpush.msra.mxu0 0.0
        %315 = vmatpush.msra.mxu0 0.0
        %316 = vmatpush.msra.mxu0 0.0
        %317 = vmatpush.msra.mxu0 0.0
        %318 = vmatpush.msra.mxu0 0.0
        %319 = vmatpush.msra.mxu0 0.0
        %320 = vmatpush.msra.mxu0 0.0
        %321 = vmatpush.msra.mxu0 %v300
        %322 = vmatmul.f32.gmra.mxu0 %v304
        %v323 = vpop.f32.mrf.mxu0
        %v324 = vadd.f32 %v301, %v323
        %325 = vdwg.mxu0
        %v326 = vadd.f32 %v324, 3.0
        %v327 = vmax.f32 %v326, 0.0
        %v328 = vmin.f32 %v327, 6.0
        %v329 = vmul.f32 %v328, 0.16666667
        %v330 = vperm.slane %v329, 0
        %v331 = vlaneseq
        %v332 = vshrl.u32 %v331, 7
        %334 = vset.pattern.permute.xlu0 %v332
        %335 = vperm.xlu0 %334, %v330
        %v336 = vpop.permute.xlu0 %335
        %v337 = vlaneseq
        %v338 = vshrl.u32 %v337, 7
        %v339 = vadd.s32 %v338, 8
        %340 = vset.pattern.permute.xlu0 %v339
        %341 = vperm.xlu0 %340, %v330
        %v342 = vpop.permute.xlu0 %341
        %v343 = vmul.f32 %v245, %v336
        %v344 = vmul.f32 %v246, %v336
        %v345 = vmul.f32 %v247, %v342
        %v346 = vmul.f32 %v248, %v342
        %347 = vst [vmem:[%s244] sm:$0xff] %v343
        %348 = vst [vmem:[%s244 + $0x8] sm:$0xff] %v344
        %349 = vst [vmem:[%s244 + $0x10] sm:$0xff] %v345
        %350 = vst [vmem:[%s244 + $0x18] sm:$0xff] %v346
        %s351 = sand.u32 %s140, 1
        %s352 = scalar_lea.sflag [#allocation4], %s351
        %s353 = sand.u32 %s140, 1
        %s354 = smul.addr %s353, 32
        %s355 = scalar_lea.vmem [#allocation5], %s354
        // Predicated region
        $region45: #{tpu_custom_call.1} parent=39 // pred_check
          %p356 = pneg %p150
        $region46: #{tpu_custom_call.1} parent=39 // pred_check_branch
          %358 = sbr.rel (%p356) target = $region48
        $region47: #{tpu_custom_call.1} parent=39 // pred_region
          %360 = vsyncadd %s352, 0
          %s361 = smul.addr %s22, 4
          %s362 = smul.addr %s361, 8
          %s363 = scalar_lea.hbm %s5, %s362
          %s364 = sshll.u32 %s355, 4
          %s365 = int_to_ptr.vmem [resolvable:$true] %s364
          %s366 = sshll.u32 %s363, 4
          %s367 = int_to_ptr.hbm [resolvable:$true] %s366
          %372 = dma.vmem_to_hbm [thread:$0]  %s365, 512, %s367, %s352, 256, 256, 16
        $region48: #{tpu_custom_call.1} parent=39 // pred_fallthru
          _
      $region40: #{tpu_custom_call.1} parent=5 // pred_fallthru
        _
      %p373 = scmp.le.s32.totalorder 2, %s17
      // Predicated region
      $region49: #{tpu_custom_call.1} parent=5 // pred_check
        %p374 = pneg %p373
      $region50: #{tpu_custom_call.1} parent=5 // pred_check_branch
        %376 = sbr.rel (%p374) target = $region52
      $region51: #{tpu_custom_call.1} parent=5 // pred_region
        %s377 = ssub.s32 %s17, 2
        // Predicated region
        $region53: #{tpu_custom_call.1} parent=51 // pred_check
          %p378 = pneg %p156
        $region54: #{tpu_custom_call.1} parent=51 // pred_check_branch
          %380 = sbr.rel (%p378) target = $region56
        $region55: #{tpu_custom_call.1} parent=51 // pred_region
          %s381 = sand.u32 %s141, 1
          %s382 = scalar_lea.sflag [#allocation4], %s381
          %s383 = sand.u32 %s141, 1
          %s384 = smul.addr %s383, 32
          %s385 = scalar_lea.vmem [#allocation5], %s384
          %387 = dma.done %s382, 512
        $region56: #{tpu_custom_call.1} parent=51 // pred_fallthru
          _
      $region52: #{tpu_custom_call.1} parent=5 // pred_fallthru
        _
    $region6: #{tpu_custom_call.1} parent=1 // loop_footer
      %s21 = sadd.s32 1, %s17
    $region7: #{tpu_custom_call.1} parent=1 // loop_footer_branch
      %16 = sbr.rel target = $region3
    $region8: #{tpu_custom_call.1} parent=1 // loop_exit
      _
    %388 = vsyncpa [#allocation3], 1
    %s389 = scalar_lea.sflag [#allocation3], 1
    %390 = vsyncpa %s389, 1
    %391 = vsyncpa [#allocation4], 1
    %s392 = scalar_lea.sflag [#allocation4], 1
    %393 = vsyncpa %s392, 1

</llo_original>
